<compile_context>
chip_gen: v7x
topology: tpu7x:2x2x1
jax: 0.10.0
libtpu: 0.0.40
codegen_flags: <defaults>
</compile_context>

<pallas_src>
import functools

import jax
import jax.numpy as jnp
from jax.experimental import pallas as pl
from jax.experimental.pallas import tpu as pltpu

LANE = 128
_NEG_BIG = -1e30  # softmax pad-lane bias -> exp underflows to exactly 0


def _round_up(x, m):
    return (x + m - 1) // m * m


def assa_kernel(ids_ref, emb_ref, lin_wt_ref, lin_b_ref, s_emb_ref,
                r_ref, a_ref, enc_acc, *, approx_recip):
    """Grid = (batch tiles, vocab tiles).  Vocab axis is a reduction axis:
    enc is accumulated in VMEM scratch and the head is run on the last step."""
    vi = pl.program_id(1)
    nv = pl.num_programs(1)

    bm, L = ids_ref.shape
    tV = emb_ref.shape[0]
    S = s_emb_ref.shape[0]

    @pl.when(vi == 0)
    def _init():
        enc_acc[...] = jnp.zeros_like(enc_acc)

    # ---- EmbeddingBag(mean) restricted to this vocab tile -------------------
    # counts[b, v] = #{l : ids[b, l] == v_base + v}, built one token column at a
    # time so peak live data is a single (bm, tV) slab (no 3-D one-hot).
    ids = ids_ref[...]                                            # (bm, L) int32
    vocab = jax.lax.broadcasted_iota(jnp.int32, (bm, tV), 1) + vi * tV
    counts = jnp.zeros((bm, tV), jnp.float32)
    for l in range(L):  # L is small & static; for long bags use lax.fori_loop
        counts = counts + (ids[:, l:l + 1] == vocab).astype(jnp.float32)

    # histogram @ embedding tile -> partial enc, accumulated in f32 scratch.
    enc_acc[...] += jnp.dot(counts.astype(emb_ref.dtype), emb_ref[...],
                            preferred_element_type=jnp.float32)   # (bm, E)

    # ---- head (linear + softmax + reconstruction) on the last vocab step ----
    @pl.when(vi == nv - 1)
    def _finalize():
        enc = enc_acc[...] * (1.0 / L)                            # mean over bag

        # Linear(E -> S), lane-padded to 128 logits.  Padded lanes carry a
        # -1e30 bias so softmax assigns them exactly 0 probability.
        x = jnp.dot(enc, lin_wt_ref[...],
                    preferred_element_type=jnp.float32) + lin_b_ref[...]
        x = x - jnp.max(x, axis=1, keepdims=True)
        e = jnp.exp(x)
        denom = jnp.sum(e, axis=1, keepdims=True)
        if approx_recip:
            a_probs = e * pl.reciprocal(denom, approx=True)       # EUP slot
        else:
            a_probs = e / denom                                   # exact parity
        a_ref[...] = a_probs                                      # dense 128-lane store

        # Reconstruction r = a_probs @ s_emb with K = S (tiny): do it on the
        # VPU as S broadcast-FMAs instead of an MXU round-trip.
        r = a_probs[:, 0:1] * s_emb_ref[0:1, :]
        for s in range(1, S):
            r = r + a_probs[:, s:s + 1] * s_emb_ref[s:s + 1, :]
        r_ref[...] = r                                            # dense 128-lane store


@functools.partial(
    jax.jit,
    static_argnames=("bm", "tv", "approx_softmax_recip", "mxu_dtype"))
def sentiment_autoencoder_forward(ids, asp_probs, emb, lin_w, lin_b, s_emb,
                                  *, bm=None, tv=None,
                                  approx_softmax_recip=False, mxu_dtype=None):
    """ids (B, L) int32, emb (V, E), lin_w (S, E), lin_b (S,), s_emb (S, E).
    Returns (r (B, E), a_probs (B, S)).  asp_probs is unused (dead in 'centr')."""
    del asp_probs
    B, L = ids.shape
    V, E = emb.shape
    S = s_emb.shape[0]

    # Batch tiling: one big MXU-friendly tile (<=128 rows); pad B, slice back.
    if bm is None:
        bm = min(128, _round_up(B, 8))
    assert bm % 8 == 0 or bm == B
    B_pad = _round_up(B, bm)

    # Vocab tiling: stream the embedding table in (tv, E) tiles (reduction axis)
    # so the full table never has to be VMEM-resident (critical on v7x, 64 MiB).
    if tv is None:
        tv = min(_round_up(V, 8), 2048)
    V_pad = _round_up(V, tv)

    # Lane-dense (128-wide) output slabs.
    S_pad = _round_up(max(S, 1), LANE)
    E_out = _round_up(max(E, 1), LANE)

    # Host/XLA-side padding of the small parameter tensors (outside the kernel).
    ids_p = jnp.pad(ids, ((0, B_pad - B), (0, 0)))                  # pad rows -> id 0
    emb_p = jnp.pad(emb, ((0, V_pad - V), (0, 0)))                  # zero vocab rows
    if mxu_dtype is not None:
        emb_p = emb_p.astype(mxu_dtype)                             # bf16 MXU path
    lin_wt = jnp.pad(lin_w.T, ((0, 0), (0, S_pad - S)))             # (E, S_pad)
    lin_b_p = jnp.pad(lin_b.reshape(1, S), ((0, 0), (0, S_pad - S)),
                      constant_values=_NEG_BIG)                     # (1, S_pad)
    s_emb_p = jnp.pad(s_emb, ((0, 0), (0, E_out - E)))              # (S, E_out)

    n_b = B_pad // bm
    n_v = V_pad // tv

    kernel = functools.partial(assa_kernel, approx_recip=approx_softmax_recip)

    # VMEM budget: double-buffered blocks + f32 accumulator, capped for v7x.
    est = 2 * (bm * L * 4 + tv * E * emb_p.dtype.itemsize + E * S_pad * 4
               + S_pad * 4 + S * E_out * 4 + bm * E_out * 4 + bm * S_pad * 4) \
        + bm * E * 4
    vmem_limit = int(min(max(2 * est, 32 * 2 ** 20), 64 * 2 ** 20))

    r_pad, a_pad = pl.pallas_call(
        kernel,
        out_shape=(
            jax.ShapeDtypeStruct((B_pad, E_out), jnp.float32),
            jax.ShapeDtypeStruct((B_pad, S_pad), jnp.float32),
        ),
        grid=(n_b, n_v),
        in_specs=[
            pl.BlockSpec((bm, L), lambda i, v: (i, 0)),      # token ids (batch tile)
            pl.BlockSpec((tv, E), lambda i, v: (v, 0)),      # embedding table tile
            pl.BlockSpec((E, S_pad), lambda i, v: (0, 0)),   # lin weight^T (padded)
            pl.BlockSpec((1, S_pad), lambda i, v: (0, 0)),   # lin bias (padded, -1e30)
            pl.BlockSpec((S, E_out), lambda i, v: (0, 0)),   # sentiment emb (padded)
        ],
        out_specs=(
            pl.BlockSpec((bm, E_out), lambda i, v: (i, 0)),  # r (lane-dense)
            pl.BlockSpec((bm, S_pad), lambda i, v: (i, 0)),  # a_probs (lane-dense)
        ),
        scratch_shapes=[pltpu.VMEM((bm, E), jnp.float32)],   # enc accumulator
        compiler_params=pltpu.CompilerParams(
            dimension_semantics=("parallel", "arbitrary"),
            vmem_limit_bytes=vmem_limit,
        ),
    )(ids_p, emb_p, lin_wt, lin_b_p, s_emb_p)

    return r_pad[:B, :E], a_pad[:B, :S]


def _xavier_uniform(key, shape):
    fan_in, fan_out = shape[-1], shape[-2]
    bound = jnp.sqrt(6.0 / (fan_in + fan_out))
    return jax.random.uniform(key, shape, jnp.float32, -bound, bound)


if __name__ == "__main__":
    # Small, deterministic problem consistent with the module's __init__.
    B, L = 16, 8          # batch of segments, words per segment
    V, E = 64, 32         # vocab_size, emb_size
    A, S = 5, 2           # num_aspects, num_sens

    key = jax.random.PRNGKey(0)
    k_ids, k_asp, k_emb, k_lw, k_lb, k_se = jax.random.split(key, 6)

    ids = jax.random.randint(k_ids, (B, L), 0, V, dtype=jnp.int32)
    asp_probs = jax.nn.softmax(
        jax.random.normal(k_asp, (B, A), jnp.float32), axis=1)

    # Parameters (deterministic, synthetic — no checkpoint load).
    emb = _xavier_uniform(k_emb, (V, E))                       # seg_encoder.weight
    lin_w = _xavier_uniform(k_lw, (S, E))                      # nn.Linear(E, S).weight
    lin_b = 0.1 * jax.random.normal(k_lb, (S,), jnp.float32)   # .bias
    s_emb = _xavier_uniform(k_se, (S, E))                      # sentiment embeddings

    r, a_probs = sentiment_autoencoder_forward(
        ids, asp_probs, emb, lin_w, lin_b, s_emb)
    jax.block_until_ready((r, a_probs))

    # Pure-JAX reference of the same forward pass.
    ref_enc = emb[ids].mean(axis=1)                            # EmbeddingBag(mean)
    ref_x = ref_enc @ lin_w.T + lin_b
    ref_a = jax.nn.softmax(ref_x, axis=1)
    ref_r = ref_a @ s_emb

    assert r.shape == (B, E) and a_probs.shape == (B, S)
    assert jnp.allclose(a_probs, ref_a, atol=1e-5, rtol=1e-5)
    assert jnp.allclose(r, ref_r, atol=1e-5, rtol=1e-5)

    print("KERNEL_OK")
</pallas_src>

<mosaic_0001>
module attributes {stable_mosaic.version = 11 : i64} {
  func.func @assa_kernel(%arg0: i32, %arg1: i32, %arg2: memref<16x8xi32, #tpu.memory_space<vmem>>, %arg3: memref<64x32xf32, #tpu.memory_space<vmem>>, %arg4: memref<32x128xf32, #tpu.memory_space<vmem>>, %arg5: memref<1x128xf32, #tpu.memory_space<vmem>>, %arg6: memref<2x128xf32, #tpu.memory_space<vmem>>, %arg7: memref<16x128xf32, #tpu.memory_space<vmem>>, %arg8: memref<16x128xf32, #tpu.memory_space<vmem>>, %arg9: memref<16x32xf32, #tpu.memory_space<vmem>>) attributes {dimension_semantics = [#tpu.dimension_semantics<parallel>, #tpu.dimension_semantics<arbitrary>], iteration_bounds = array<i64: 1, 1>, scalar_prefetch = 0 : i64, scratch_operands = 1 : i64, tpu.core_type = #tpu.core_type<tc>, window_params = [{transform_indices = @transform_0, window_bounds = array<i64: 16, 8>}, {transform_indices = @transform_1, window_bounds = array<i64: 64, 32>}, {pipeline_mode = #tpu.pipeline_mode<synchronous>, transform_indices = @transform_2, window_bounds = array<i64: 32, 128>}, {pipeline_mode = #tpu.pipeline_mode<synchronous>, transform_indices = @transform_3, window_bounds = array<i64: 1, 128>}, {pipeline_mode = #tpu.pipeline_mode<synchronous>, transform_indices = @transform_4, window_bounds = array<i64: 2, 128>}, {transform_indices = @transform_5, window_bounds = array<i64: 16, 128>}, {transform_indices = @transform_6, window_bounds = array<i64: 16, 128>}]} {
    %c0_i32 = arith.constant 0 : i32
    %0 = arith.cmpi eq, %arg1, %c0_i32 : i32
    %1 = arith.extui %0 : i1 to i32
    %c0_i32_0 = arith.constant 0 : i32
    %2 = arith.cmpi ne, %1, %c0_i32_0 : i32
    scf.if %2 {
      %cst_11 = arith.constant 0.000000e+00 : f32
      %65 = vector.broadcast %cst_11 : f32 to vector<16x32xf32>
      %c0_12 = arith.constant 0 : index
      %c0_13 = arith.constant 0 : index
      %66 = vector.load %arg9[%c0_12, %c0_13] : memref<16x32xf32, #tpu.memory_space<vmem>>, vector<16x32xf32>
      tpu.vector_store %arg9[%c0_12, %c0_13], %65 {strides = array<i32>} : memref<16x32xf32, #tpu.memory_space<vmem>>, vector<16x32xf32>,
    } else {
    }
    %c0 = arith.constant 0 : index
    %c0_1 = arith.constant 0 : index
    %3 = vector.load %arg2[%c0, %c0_1] : memref<16x8xi32, #tpu.memory_space<vmem>>, vector<16x8xi32>
    %4 = tpu.iota {dimensions = array<i32: 1>} : vector<16x64xi32>
    %c64_i32 = arith.constant 64 : i32
    %5 = arith.muli %arg1, %c64_i32 : i32
    %6 = vector.broadcast %5 : i32 to vector<16x64xi32>
    %7 = arith.addi %4, %6 : vector<16x64xi32>
    %cst = arith.constant 0.000000e+00 : f32
    %8 = vector.broadcast %cst : f32 to vector<16x64xf32>
    %9 = vector.extract_strided_slice %3 {offsets = [0, 0], sizes = [16, 1], strides = [1, 1]} : vector<16x8xi32> to vector<16x1xi32>
    %10 = vector.broadcast %9 : vector<16x1xi32> to vector<16x64xi32>
    %11 = arith.cmpi eq, %10, %7 : vector<16x64xi32>
    %12 = arith.extui %11 : vector<16x64xi1> to vector<16x64xi32>
    %13 = arith.sitofp %12 : vector<16x64xi32> to vector<16x64xf32>
    %14 = arith.addf %8, %13 : vector<16x64xf32>
    %15 = vector.extract_strided_slice %3 {offsets = [0, 1], sizes = [16, 1], strides = [1, 1]} : vector<16x8xi32> to vector<16x1xi32>
    %16 = vector.broadcast %15 : vector<16x1xi32> to vector<16x64xi32>
    %17 = arith.cmpi eq, %16, %7 : vector<16x64xi32>
    %18 = arith.extui %17 : vector<16x64xi1> to vector<16x64xi32>
    %19 = arith.sitofp %18 : vector<16x64xi32> to vector<16x64xf32>
    %20 = arith.addf %14, %19 : vector<16x64xf32>
    %21 = vector.extract_strided_slice %3 {offsets = [0, 2], sizes = [16, 1], strides = [1, 1]} : vector<16x8xi32> to vector<16x1xi32>
    %22 = vector.broadcast %21 : vector<16x1xi32> to vector<16x64xi32>
    %23 = arith.cmpi eq, %22, %7 : vector<16x64xi32>
    %24 = arith.extui %23 : vector<16x64xi1> to vector<16x64xi32>
    %25 = arith.sitofp %24 : vector<16x64xi32> to vector<16x64xf32>
    %26 = arith.addf %20, %25 : vector<16x64xf32>
    %27 = vector.extract_strided_slice %3 {offsets = [0, 3], sizes = [16, 1], strides = [1, 1]} : vector<16x8xi32> to vector<16x1xi32>
    %28 = vector.broadcast %27 : vector<16x1xi32> to vector<16x64xi32>
    %29 = arith.cmpi eq, %28, %7 : vector<16x64xi32>
    %30 = arith.extui %29 : vector<16x64xi1> to vector<16x64xi32>
    %31 = arith.sitofp %30 : vector<16x64xi32> to vector<16x64xf32>
    %32 = arith.addf %26, %31 : vector<16x64xf32>
    %33 = vector.extract_strided_slice %3 {offsets = [0, 4], sizes = [16, 1], strides = [1, 1]} : vector<16x8xi32> to vector<16x1xi32>
    %34 = vector.broadcast %33 : vector<16x1xi32> to vector<16x64xi32>
    %35 = arith.cmpi eq, %34, %7 : vector<16x64xi32>
    %36 = arith.extui %35 : vector<16x64xi1> to vector<16x64xi32>
    %37 = arith.sitofp %36 : vector<16x64xi32> to vector<16x64xf32>
    %38 = arith.addf %32, %37 : vector<16x64xf32>
    %39 = vector.extract_strided_slice %3 {offsets = [0, 5], sizes = [16, 1], strides = [1, 1]} : vector<16x8xi32> to vector<16x1xi32>
    %40 = vector.broadcast %39 : vector<16x1xi32> to vector<16x64xi32>
    %41 = arith.cmpi eq, %40, %7 : vector<16x64xi32>
    %42 = arith.extui %41 : vector<16x64xi1> to vector<16x64xi32>
    %43 = arith.sitofp %42 : vector<16x64xi32> to vector<16x64xf32>
    %44 = arith.addf %38, %43 : vector<16x64xf32>
    %45 = vector.extract_strided_slice %3 {offsets = [0, 6], sizes = [16, 1], strides = [1, 1]} : vector<16x8xi32> to vector<16x1xi32>
    %46 = vector.broadcast %45 : vector<16x1xi32> to vector<16x64xi32>
    %47 = arith.cmpi eq, %46, %7 : vector<16x64xi32>
    %48 = arith.extui %47 : vector<16x64xi1> to vector<16x64xi32>
    %49 = arith.sitofp %48 : vector<16x64xi32> to vector<16x64xf32>
    %50 = arith.addf %44, %49 : vector<16x64xf32>
    %51 = vector.extract_strided_slice %3 {offsets = [0, 7], sizes = [16, 1], strides = [1, 1]} : vector<16x8xi32> to vector<16x1xi32>
    %52 = vector.broadcast %51 : vector<16x1xi32> to vector<16x64xi32>
    %53 = arith.cmpi eq, %52, %7 : vector<16x64xi32>
    %54 = arith.extui %53 : vector<16x64xi1> to vector<16x64xi32>
    %55 = arith.sitofp %54 : vector<16x64xi32> to vector<16x64xf32>
    %56 = arith.addf %50, %55 : vector<16x64xf32>
    %c0_2 = arith.constant 0 : index
    %c0_3 = arith.constant 0 : index
    %57 = vector.load %arg9[%c0_2, %c0_3] : memref<16x32xf32, #tpu.memory_space<vmem>>, vector<16x32xf32>
    %c0_4 = arith.constant 0 : index
    %c0_5 = arith.constant 0 : index
    %58 = vector.load %arg3[%c0_4, %c0_5] : memref<64x32xf32, #tpu.memory_space<vmem>>, vector<64x32xf32>
    %cst_6 = arith.constant dense<0.000000e+00> : vector<16x32xf32>
    %59 = tpu.matmul %56, %58, %cst_6 {dimension_numbers = #tpu.dot_dimension_numbers<[1], [0], [0], [1], [0, 0, 1, 1], [], []>} : vector<16x64xf32>, vector<64x32xf32>, vector<16x32xf32> -> vector<16x32xf32>
    %60 = arith.addf %57, %59 : vector<16x32xf32>
    %c0_7 = arith.constant 0 : index
    %c0_8 = arith.constant 0 : index
    %61 = vector.load %arg9[%c0_7, %c0_8] : memref<16x32xf32, #tpu.memory_space<vmem>>, vector<16x32xf32>
    tpu.vector_store %arg9[%c0_7, %c0_8], %60 {strides = array<i32>} : memref<16x32xf32, #tpu.memory_space<vmem>>, vector<16x32xf32>,
    %c0_i32_9 = arith.constant 0 : i32
    %62 = arith.cmpi eq, %arg1, %c0_i32_9 : i32
    %63 = arith.extui %62 : i1 to i32
    %c0_i32_10 = arith.constant 0 : i32
    %64 = arith.cmpi ne, %63, %c0_i32_10 : i32
    scf.if %64 {
      %c0_11 = arith.constant 0 : index
      %c0_12 = arith.constant 0 : index
      %65 = vector.load %arg9[%c0_11, %c0_12] : memref<16x32xf32, #tpu.memory_space<vmem>>, vector<16x32xf32>
      %cst_13 = arith.constant 1.250000e-01 : f32
      %66 = vector.broadcast %cst_13 : f32 to vector<16x32xf32>
      %67 = arith.mulf %65, %66 : vector<16x32xf32>
      %c0_14 = arith.constant 0 : index
      %c0_15 = arith.constant 0 : index
      %68 = vector.load %arg4[%c0_14, %c0_15] : memref<32x128xf32, #tpu.memory_space<vmem>>, vector<32x128xf32>
      %cst_16 = arith.constant dense<0.000000e+00> : vector<16x128xf32>
      %69 = tpu.matmul %67, %68, %cst_16 {dimension_numbers = #tpu.dot_dimension_numbers<[1], [0], [0], [1], [0, 0, 1, 1], [], []>} : vector<16x32xf32>, vector<32x128xf32>, vector<16x128xf32> -> vector<16x128xf32>
      %c0_17 = arith.constant 0 : index
      %c0_18 = arith.constant 0 : index
      %70 = vector.load %arg5[%c0_17, %c0_18] : memref<1x128xf32, #tpu.memory_space<vmem>>, vector<1x128xf32>
      %71 = vector.broadcast %70 : vector<1x128xf32> to vector<16x128xf32>
      %72 = arith.addf %69, %71 : vector<16x128xf32>
      %cst_19 = arith.constant dense<0xFF800000> : vector<16xf32>
      %73 = vector.multi_reduction <maximumf>, %72, %cst_19 [1] : vector<16x128xf32> to vector<16xf32>
      %74 = vector.shape_cast %73 : vector<16xf32> to vector<16x1xf32>
      %75 = vector.broadcast %74 : vector<16x1xf32> to vector<16x128xf32>
      %76 = arith.subf %72, %75 : vector<16x128xf32>
      %77 = math.exp %76 : vector<16x128xf32>
      %cst_20 = arith.constant dense<0.000000e+00> : vector<16xf32>
      %78 = vector.multi_reduction <add>, %77, %cst_20 [1] : vector<16x128xf32> to vector<16xf32>
      %79 = vector.shape_cast %78 : vector<16xf32> to vector<16x1xf32>
      %80 = vector.broadcast %79 : vector<16x1xf32> to vector<16x128xf32>
      %81 = arith.divf %77, %80 : vector<16x128xf32>
      %c0_21 = arith.constant 0 : index
      %c0_22 = arith.constant 0 : index
      %82 = vector.load %arg8[%c0_21, %c0_22] : memref<16x128xf32, #tpu.memory_space<vmem>>, vector<16x128xf32>
      tpu.vector_store %arg8[%c0_21, %c0_22], %81 {strides = array<i32>} : memref<16x128xf32, #tpu.memory_space<vmem>>, vector<16x128xf32>,
      %83 = vector.extract_strided_slice %81 {offsets = [0, 0], sizes = [16, 1], strides = [1, 1]} : vector<16x128xf32> to vector<16x1xf32>
      %c0_23 = arith.constant 0 : index
      %c0_24 = arith.constant 0 : index
      %84 = vector.load %arg6[%c0_23, %c0_24] : memref<2x128xf32, #tpu.memory_space<vmem>>, vector<1x128xf32>
      %85 = vector.broadcast %83 : vector<16x1xf32> to vector<16x128xf32>
      %86 = vector.broadcast %84 : vector<1x128xf32> to vector<16x128xf32>
      %87 = arith.mulf %85, %86 : vector<16x128xf32>
      %88 = vector.extract_strided_slice %81 {offsets = [0, 1], sizes = [16, 1], strides = [1, 1]} : vector<16x128xf32> to vector<16x1xf32>
      %c1 = arith.constant 1 : index
      %c0_25 = arith.constant 0 : index
      %89 = vector.load %arg6[%c1, %c0_25] : memref<2x128xf32, #tpu.memory_space<vmem>>, vector<1x128xf32>
      %90 = vector.broadcast %88 : vector<16x1xf32> to vector<16x128xf32>
      %91 = vector.broadcast %89 : vector<1x128xf32> to vector<16x128xf32>
      %92 = arith.mulf %90, %91 : vector<16x128xf32>
      %93 = arith.addf %87, %92 : vector<16x128xf32>
      %c0_26 = arith.constant 0 : index
      %c0_27 = arith.constant 0 : index
      %94 = vector.load %arg7[%c0_26, %c0_27] : memref<16x128xf32, #tpu.memory_space<vmem>>, vector<16x128xf32>
      tpu.vector_store %arg7[%c0_26, %c0_27], %93 {strides = array<i32>} : memref<16x128xf32, #tpu.memory_space<vmem>>, vector<16x128xf32>,
    } else {
    }
    return
  }
  func.func @transform_0(%arg0: i32, %arg1: i32) -> (i32, i32) {
    %c0_i32 = arith.constant 0 : i32
    %c0_i32_0 = arith.constant 0 : i32
    return %arg0, %c0_i32 : i32, i32
  }
  func.func @transform_1(%arg0: i32, %arg1: i32) -> (i32, i32) {
    %c0_i32 = arith.constant 0 : i32
    %c0_i32_0 = arith.constant 0 : i32
    return %arg1, %c0_i32 : i32, i32
  }
  func.func @transform_2(%arg0: i32, %arg1: i32) -> (i32, i32) {
    %c0_i32 = arith.constant 0 : i32
    %c0_i32_0 = arith.constant 0 : i32
    %c0_i32_1 = arith.constant 0 : i32
    return %c0_i32, %c0_i32_0 : i32, i32
  }
  func.func @transform_3(%arg0: i32, %arg1: i32) -> (i32, i32) {
    %c0_i32 = arith.constant 0 : i32
    %c0_i32_0 = arith.constant 0 : i32
    %c0_i32_1 = arith.constant 0 : i32
    return %c0_i32, %c0_i32_0 : i32, i32
  }
  func.func @transform_4(%arg0: i32, %arg1: i32) -> (i32, i32) {
    %c0_i32 = arith.constant 0 : i32
    %c0_i32_0 = arith.constant 0 : i32
    %c0_i32_1 = arith.constant 0 : i32
    return %c0_i32, %c0_i32_0 : i32, i32
  }
  func.func @transform_5(%arg0: i32, %arg1: i32) -> (i32, i32) {
    %c0_i32 = arith.constant 0 : i32
    %c0_i32_0 = arith.constant 0 : i32
    return %arg0, %c0_i32 : i32, i32
  }
  func.func @transform_6(%arg0: i32, %arg1: i32) -> (i32, i32) {
    %c0_i32 = arith.constant 0 : i32
    %c0_i32_0 = arith.constant 0 : i32
    return %arg0, %c0_i32 : i32, i32
  }
}

</mosaic_0001>

<llo_original>
// kernel: sentiment_autoencoder_forward.1
$region0: #{sentiment_autoencoder_forward.1}
  #allocation0 [shape = 'u32[]', space=smem, size = 0x4, offset = 0x4, fixed_abs, tag = 'smem constant byte address 0x4 - core index']
  #allocation1 [shape = 'u32[144,128]{1,0:T(1,128)}', space=vmem, size = 0x12000, scoped, tag = 'internal scratch']
  #allocation2 [shape = 'f32[16,32]{1,0:T(8,128)}', space=vmem, size = 0x2000, scoped, tag = 'scratch operand']
  %s0 = inlined_call_operand.vmem [shape: s32[16,8], index: 0, kind: input, shape index: {}]
  %s1 = inlined_call_operand.vmem [shape: f32[64,32], index: 1, kind: input, shape index: {}]
  %s2 = inlined_call_operand.vmem [shape: f32[32,128], index: 2, kind: input, shape index: {}]
  %s3 = inlined_call_operand.vmem [shape: f32[1,128], index: 3, kind: input, shape index: {}]
  %s4 = inlined_call_operand.vmem [shape: f32[2,128], index: 4, kind: input, shape index: {}]
  %s5 = inlined_call_operand.hbm [shape: f32[16,128], index: 5, kind: output, shape index: {0}]
  %s6 = inlined_call_operand.vmem [shape: f32[16,128], index: 6, kind: output, shape index: {1}]
  %7 = xla_tuple %s5, %s6
  %s8 = sld [smem:[#allocation0]]
  $region46: #{sentiment_autoencoder_forward.1} parent=0
    _
  %s10 = ssub.s32 1, %s8
  %s11 = scalar_select 0, %s10, %s8
  $region1: #{sentiment_autoencoder_forward.1} parent=0
    #allocation3 [shape = 'u8[8192]{0}', space=vmem, size = 0x2000, scoped, tag = 'output window, operand 0, single buffered']
    #allocation4 [shape = 's32[1]{0}', space=sflag, size = 0x4, scoped, tag = 'scoped memory for sentiment_autoencoder_forward.1']
    %12 = vsyncpa [#allocation4], 0
    // Predicated region
    $region2: #{sentiment_autoencoder_forward.1} parent=1 // pred_check
      _
    $region3: #{sentiment_autoencoder_forward.1} parent=1 // pred_check_branch
      %14 = sbr.rel (0) target = $region5
    $region4: #{sentiment_autoencoder_forward.1} parent=1 // pred_region
      _
    $region5: #{sentiment_autoencoder_forward.1} parent=1 // pred_fallthru
      _
    // Predicated region
    $region6: #{sentiment_autoencoder_forward.1} parent=1 // pred_check
      _
    $region7: #{sentiment_autoencoder_forward.1} parent=1 // pred_check_branch
      %16 = sbr.rel (0) target = $region9
    $region8: #{sentiment_autoencoder_forward.1} parent=1 // pred_region
      _
    $region9: #{sentiment_autoencoder_forward.1} parent=1 // pred_fallthru
      _
    // Predicated region
    $region10: #{sentiment_autoencoder_forward.1} parent=1 // pred_check
      _
    $region11: #{sentiment_autoencoder_forward.1} parent=1 // pred_check_branch
      %18 = sbr.rel (0) target = $region13
    $region12: #{sentiment_autoencoder_forward.1} parent=1 // pred_region
      _
    $region13: #{sentiment_autoencoder_forward.1} parent=1 // pred_fallthru
      _
    // Predicated region
    $region14: #{sentiment_autoencoder_forward.1} parent=1 // pred_check
      _
    $region15: #{sentiment_autoencoder_forward.1} parent=1 // pred_check_branch
      %20 = sbr.rel (0) target = $region17
    $region16: #{sentiment_autoencoder_forward.1} parent=1 // pred_region
      _
    $region17: #{sentiment_autoencoder_forward.1} parent=1 // pred_fallthru
      _
    // Predicated region
    $region18: #{sentiment_autoencoder_forward.1} parent=1 // pred_check
      _
    $region19: #{sentiment_autoencoder_forward.1} parent=1 // pred_check_branch
      %22 = sbr.rel (0) target = $region21
    $region20: #{sentiment_autoencoder_forward.1} parent=1 // pred_region
      _
    $region21: #{sentiment_autoencoder_forward.1} parent=1 // pred_fallthru
      _
    %p23 = scmp.eq.s32.totalorder 0, 0
    // Predicated region
    $region22: #{sentiment_autoencoder_forward.1} parent=1 // pred_check
      %p24 = pneg %p23
    $region23: #{sentiment_autoencoder_forward.1} parent=1 // pred_check_branch
      %26 = sbr.rel (%p24) target = $region25
    $region24: #{sentiment_autoencoder_forward.1} parent=1 // pred_region
      %vm27 = vcmask 261120
      %28 = vst.msk [vmem:[#allocation2] sm:$0xff] %vm27, 0.0
      %29 = vst.msk [vmem:[#allocation2 + $0x8] sm:$0xff] %vm27, 0.0
    $region25: #{sentiment_autoencoder_forward.1} parent=1 // pred_fallthru
      _
    %v30 = vld [vmem:[%s0] sm:$0xff]
    %v31 = vld [vmem:[%s0 + $0x8] sm:$0xff]
    %v32 = vlaneseq
    %v33 = vand.u32 %v32, 127
    %s34 = smul.u32 0, 64
    %v35 = vstv %s34
    %v36 = vadd.s32 %v33, %v35
    %37 = vset.pattern.permute.xlu0 0
    %38 = vperm.xlu0 %37, %v30
    %v39 = vpop.permute.xlu0 %38
    %40 = vset.pattern.permute.xlu0 0
    %41 = vperm.xlu0 %40, %v31
    %v42 = vpop.permute.xlu0 %41
    %vm43 = vcmp.eq.s32.totalorder %v39, %v36
    %vm44 = vcmp.eq.s32.totalorder %v42, %v36
    %v45 = vsel %vm43, 1, 0
    %v46 = vsel %vm44, 1, 0
    %v47 = vcvt.s32.f32 %v45
    %v48 = vcvt.s32.f32 %v46
    %v49 = vadd.f32 %v47, 0.0
    %v50 = vadd.f32 %v48, 0.0
    %51 = vset.pattern.permute.xlu0 1
    %52 = vperm.xlu0 %51, %v30
    %v53 = vpop.permute.xlu0 %52
    %54 = vset.pattern.permute.xlu0 1
    %55 = vperm.xlu0 %54, %v31
    %v56 = vpop.permute.xlu0 %55
    %vm57 = vcmp.eq.s32.totalorder %v53, %v36
    %vm58 = vcmp.eq.s32.totalorder %v56, %v36
    %v59 = vsel %vm57, 1, 0
    %v60 = vsel %vm58, 1, 0
    %v61 = vcvt.s32.f32 %v59
    %v62 = vcvt.s32.f32 %v60
    %v63 = vadd.f32 %v49, %v61
    %v64 = vadd.f32 %v50, %v62
    %65 = vset.pattern.permute.xlu0 2
    %66 = vperm.xlu0 %65, %v30
    %v67 = vpop.permute.xlu0 %66
    %68 = vset.pattern.permute.xlu0 2
    %69 = vperm.xlu0 %68, %v31
    %v70 = vpop.permute.xlu0 %69
    %vm71 = vcmp.eq.s32.totalorder %v67, %v36
    %vm72 = vcmp.eq.s32.totalorder %v70, %v36
    %v73 = vsel %vm71, 1, 0
    %v74 = vsel %vm72, 1, 0
    %v75 = vcvt.s32.f32 %v73
    %v76 = vcvt.s32.f32 %v74
    %v77 = vadd.f32 %v63, %v75
    %v78 = vadd.f32 %v64, %v76
    %79 = vset.pattern.permute.xlu0 3
    %80 = vperm.xlu0 %79, %v30
    %v81 = vpop.permute.xlu0 %80
    %82 = vset.pattern.permute.xlu0 3
    %83 = vperm.xlu0 %82, %v31
    %v84 = vpop.permute.xlu0 %83
    %vm85 = vcmp.eq.s32.totalorder %v81, %v36
    %vm86 = vcmp.eq.s32.totalorder %v84, %v36
    %v87 = vsel %vm85, 1, 0
    %v88 = vsel %vm86, 1, 0
    %v89 = vcvt.s32.f32 %v87
    %v90 = vcvt.s32.f32 %v88
    %v91 = vadd.f32 %v77, %v89
    %v92 = vadd.f32 %v78, %v90
    %93 = vset.pattern.permute.xlu0 4
    %94 = vperm.xlu0 %93, %v30
    %v95 = vpop.permute.xlu0 %94
    %96 = vset.pattern.permute.xlu0 4
    %97 = vperm.xlu0 %96, %v31
    %v98 = vpop.permute.xlu0 %97
    %vm99 = vcmp.eq.s32.totalorder %v95, %v36
    %vm100 = vcmp.eq.s32.totalorder %v98, %v36
    %v101 = vsel %vm99, 1, 0
    %v102 = vsel %vm100, 1, 0
    %v103 = vcvt.s32.f32 %v101
    %v104 = vcvt.s32.f32 %v102
    %v105 = vadd.f32 %v91, %v103
    %v106 = vadd.f32 %v92, %v104
    %107 = vset.pattern.permute.xlu0 5
    %108 = vperm.xlu0 %107, %v30
    %v109 = vpop.permute.xlu0 %108
    %110 = vset.pattern.permute.xlu0 5
    %111 = vperm.xlu0 %110, %v31
    %v112 = vpop.permute.xlu0 %111
    %vm113 = vcmp.eq.s32.totalorder %v109, %v36
    %vm114 = vcmp.eq.s32.totalorder %v112, %v36
    %v115 = vsel %vm113, 1, 0
    %v116 = vsel %vm114, 1, 0
    %v117 = vcvt.s32.f32 %v115
    %v118 = vcvt.s32.f32 %v116
    %v119 = vadd.f32 %v105, %v117
    %v120 = vadd.f32 %v106, %v118
    %121 = vset.pattern.permute.xlu0 6
    %122 = vperm.xlu0 %121, %v30
    %v123 = vpop.permute.xlu0 %122
    %124 = vset.pattern.permute.xlu0 6
    %125 = vperm.xlu0 %124, %v31
    %v126 = vpop.permute.xlu0 %125
    %vm127 = vcmp.eq.s32.totalorder %v123, %v36
    %vm128 = vcmp.eq.s32.totalorder %v126, %v36
    %v129 = vsel %vm127, 1, 0
    %v130 = vsel %vm128, 1, 0
    %v131 = vcvt.s32.f32 %v129
    %v132 = vcvt.s32.f32 %v130
    %v133 = vadd.f32 %v119, %v131
    %v134 = vadd.f32 %v120, %v132
    %135 = vset.pattern.permute.xlu0 7
    %136 = vperm.xlu0 %135, %v30
    %v137 = vpop.permute.xlu0 %136
    %138 = vset.pattern.permute.xlu0 7
    %139 = vperm.xlu0 %138, %v31
    %v140 = vpop.permute.xlu0 %139
    %vm141 = vcmp.eq.s32.totalorder %v137, %v36
    %vm142 = vcmp.eq.s32.totalorder %v140, %v36
    %v143 = vsel %vm141, 1, 0
    %v144 = vsel %vm142, 1, 0
    %v145 = vcvt.s32.f32 %v143
    %v146 = vcvt.s32.f32 %v144
    %v147 = vadd.f32 %v133, %v145
    %v148 = vadd.f32 %v134, %v146
    %v149 = vld [vmem:[#allocation2] sm:$0xff]
    %v150 = vld [vmem:[#allocation2 + $0x8] sm:$0xff]
    %v151 = vld [vmem:[%s1] sm:$0xff]
    %v152 = vld [vmem:[%s1 + $0x8] sm:$0xff]
    %v153 = vld [vmem:[%s1 + $0x10] sm:$0xff]
    %v154 = vld [vmem:[%s1 + $0x18] sm:$0xff]
    %v155 = vld [vmem:[%s1 + $0x20] sm:$0xff]
    %v156 = vld [vmem:[%s1 + $0x28] sm:$0xff]
    %v157 = vld [vmem:[%s1 + $0x30] sm:$0xff]
    %v158 = vld [vmem:[%s1 + $0x38] sm:$0xff]
    %vm159 = vcmask 523264
    %v161 = vsel %vm159, %v147, 0
    %v164 = vsel %vm159, %v148, 0
    %166 = vmatprep.subr.mxu0 0.0
    %167 = vmatpush1.msra.mxu0 %v151
    %168 = vmatprep.subr.mxu0 0.0
    %169 = vmatpush1.msra.mxu0 %v152
    %170 = vmatprep.subr.mxu0 0.0
    %171 = vmatpush1.msra.mxu0 %v153
    %172 = vmatprep.subr.mxu0 0.0
    %173 = vmatpush1.msra.mxu0 %v154
    %174 = vmatprep.subr.mxu0 0.0
    %175 = vmatpush1.msra.mxu0 %v155
    %176 = vmatprep.subr.mxu0 0.0
    %177 = vmatpush1.msra.mxu0 %v156
    %178 = vmatprep.subr.mxu0 0.0
    %179 = vmatpush1.msra.mxu0 %v157
    %180 = vmatprep.subr.mxu0 0.0
    %181 = vmatpush1.msra.mxu0 %v158
    %182 = vmatprep.subr.mxu0 0.0
    %183 = vmatpush1.msra.mxu0 0.0
    %184 = vmatprep.subr.mxu0 0.0
    %185 = vmatpush1.msra.mxu0 0.0
    %186 = vmatprep.subr.mxu0 0.0
    %187 = vmatpush1.msra.mxu0 0.0
    %188 = vmatprep.subr.mxu0 0.0
    %189 = vmatpush1.msra.mxu0 0.0
    %190 = vmatprep.subr.mxu0 0.0
    %191 = vmatpush1.msra.mxu0 0.0
    %192 = vmatprep.subr.mxu0 0.0
    %193 = vmatpush1.msra.mxu0 0.0
    %194 = vmatprep.subr.mxu0 0.0
    %195 = vmatpush1.msra.mxu0 0.0
    %196 = vmatprep.subr.mxu0 0.0
    %197 = vmatpush1.msra.mxu0 0.0
    %198 = vmatprep.subr.mxu0 0.0
    %199 = vmatpush1.msra.mxu0 0.0
    %200 = vmatprep.subr.mxu0 0.0
    %201 = vmatpush1.msra.mxu0 0.0
    %202 = vmatprep.subr.mxu0 0.0
    %203 = vmatpush1.msra.mxu0 0.0
    %204 = vmatprep.subr.mxu0 0.0
    %205 = vmatpush1.msra.mxu0 0.0
    %206 = vmatprep.subr.mxu0 0.0
    %207 = vmatpush1.msra.mxu0 0.0
    %208 = vmatprep.subr.mxu0 0.0
    %209 = vmatpush1.msra.mxu0 0.0
    %210 = vmatprep.subr.mxu0 0.0
    %211 = vmatpush1.msra.mxu0 0.0
    %212 = vmatprep.subr.mxu0 0.0
    %213 = vmatpush1.msra.mxu0 0.0
    %214 = vmatprep.subr.mxu0 0.0
    %215 = vmatpush1.msra.mxu0 0.0
    %216 = vmatprep.subr.mxu0 0.0
    %217 = vmatpush1.msra.mxu0 0.0
    %218 = vmatprep.subr.mxu0 0.0
    %219 = vmatpush1.msra.mxu0 0.0
    %220 = vmatprep.subr.mxu0 0.0
    %221 = vmatpush1.msra.mxu0 0.0
    %222 = vmatprep.subr.mxu0 0.0
    %223 = vmatpush1.msra.mxu0 0.0
    %224 = vmatprep.subr.mxu0 0.0
    %225 = vmatpush1.msra.mxu0 0.0
    %226 = vmatprep.subr.mxu0 0.0
    %227 = vmatpush1.msra.mxu0 0.0
    %228 = vmatprep.subr.mxu0 0.0
    %229 = vmatpush1.msra.mxu0 0.0
    %230 = vmatprep.mubr.f32.mxu0 0.0
    %231 = vmatmul.mubr.f32.gmra.mrb[0].mxu0 %v161
    %v232 = vpop.f32.mrb[0].mxu0
    %v233 = vadd.f32 0.0, %v232
    %v234 = vpop.f32.mrb[0].mxu0
    %235 = vmatprep.mubr.f32.mxu0 0.0
    %236 = vmatmul.mubr.f32.gmra.mrb[0].mxu0 %v164
    %v237 = vpop.f32.mrb[0].mxu0
    %v238 = vadd.f32 0.0, %v237
    %v239 = vpop.f32.mrb[0].mxu0
    %240 = vdwg.mxu0
    %v241 = vadd.f32 %v149, %v233
    %v242 = vadd.f32 %v150, %v238
    %vm243 = vcmask 261120
    %244 = vst.msk [vmem:[#allocation2] sm:$0xff] %vm243, %v241
    %245 = vst.msk [vmem:[#allocation2 + $0x8] sm:$0xff] %vm243, %v242
    // Predicated region
    $region26: #{sentiment_autoencoder_forward.1} parent=1 // pred_check
      %p246 = pneg %p23
    $region27: #{sentiment_autoencoder_forward.1} parent=1 // pred_check_branch
      %248 = sbr.rel (%p246) target = $region29
    $region28: #{sentiment_autoencoder_forward.1} parent=1 // pred_region
      %v249 = vld [vmem:[#allocation2] sm:$0xff]
      %v250 = vld [vmem:[#allocation2 + $0x8] sm:$0xff]
      %v251 = vmul.f32 %v249, 0.125
      %v252 = vmul.f32 %v250, 0.125
      %v253 = vld [vmem:[%s2] sm:$0xff]
      %v254 = vld [vmem:[%s2 + $0x8] sm:$0xff]
      %v255 = vld [vmem:[%s2 + $0x10] sm:$0xff]
      %v256 = vld [vmem:[%s2 + $0x18] sm:$0xff]
      %v257 = vld [vmem:[%s3] sm:$0x1]
      %v259 = vlaneseq
      %v260 = vshrl.u32 %v259, 7
      %v261 = vsub.s32 0, %v260
      %v262 = vrot.slane %v257, %v261
      %v265 = vsel %vm243, %v251, 0
      %v268 = vsel %vm243, %v252, 0
      %270 = vmatprep.subr.mxu0 0.0
      %271 = vmatpush1.msra.mxu0 %v253
      %272 = vmatprep.subr.mxu0 0.0
      %273 = vmatpush1.msra.mxu0 %v254
      %274 = vmatprep.subr.mxu0 0.0
      %275 = vmatpush1.msra.mxu0 %v255
      %276 = vmatprep.subr.mxu0 0.0
      %277 = vmatpush1.msra.mxu0 %v256
      %278 = vmatprep.subr.mxu0 0.0
      %279 = vmatpush1.msra.mxu0 0.0
      %280 = vmatprep.subr.mxu0 0.0
      %281 = vmatpush1.msra.mxu0 0.0
      %282 = vmatprep.subr.mxu0 0.0
      %283 = vmatpush1.msra.mxu0 0.0
      %284 = vmatprep.subr.mxu0 0.0
      %285 = vmatpush1.msra.mxu0 0.0
      %286 = vmatprep.subr.mxu0 0.0
      %287 = vmatpush1.msra.mxu0 0.0
      %288 = vmatprep.subr.mxu0 0.0
      %289 = vmatpush1.msra.mxu0 0.0
      %290 = vmatprep.subr.mxu0 0.0
      %291 = vmatpush1.msra.mxu0 0.0
      %292 = vmatprep.subr.mxu0 0.0
      %293 = vmatpush1.msra.mxu0 0.0
      %294 = vmatprep.subr.mxu0 0.0
      %295 = vmatpush1.msra.mxu0 0.0
      %296 = vmatprep.subr.mxu0 0.0
      %297 = vmatpush1.msra.mxu0 0.0
      %298 = vmatprep.subr.mxu0 0.0
      %299 = vmatpush1.msra.mxu0 0.0
      %300 = vmatprep.subr.mxu0 0.0
      %301 = vmatpush1.msra.mxu0 0.0
      %302 = vmatprep.subr.mxu0 0.0
      %303 = vmatpush1.msra.mxu0 0.0
      %304 = vmatprep.subr.mxu0 0.0
      %305 = vmatpush1.msra.mxu0 0.0
      %306 = vmatprep.subr.mxu0 0.0
      %307 = vmatpush1.msra.mxu0 0.0
      %308 = vmatprep.subr.mxu0 0.0
      %309 = vmatpush1.msra.mxu0 0.0
      %310 = vmatprep.subr.mxu0 0.0
      %311 = vmatpush1.msra.mxu0 0.0
      %312 = vmatprep.subr.mxu0 0.0
      %313 = vmatpush1.msra.mxu0 0.0
      %314 = vmatprep.subr.mxu0 0.0
      %315 = vmatpush1.msra.mxu0 0.0
      %316 = vmatprep.subr.mxu0 0.0
      %317 = vmatpush1.msra.mxu0 0.0
      %318 = vmatprep.subr.mxu0 0.0
      %319 = vmatpush1.msra.mxu0 0.0
      %320 = vmatprep.subr.mxu0 0.0
      %321 = vmatpush1.msra.mxu0 0.0
      %322 = vmatprep.subr.mxu0 0.0
      %323 = vmatpush1.msra.mxu0 0.0
      %324 = vmatprep.subr.mxu0 0.0
      %325 = vmatpush1.msra.mxu0 0.0
      %326 = vmatprep.subr.mxu0 0.0
      %327 = vmatpush1.msra.mxu0 0.0
      %328 = vmatprep.subr.mxu0 0.0
      %329 = vmatpush1.msra.mxu0 0.0
      %330 = vmatprep.subr.mxu0 0.0
      %331 = vmatpush1.msra.mxu0 0.0
      %332 = vmatprep.subr.mxu0 0.0
      %333 = vmatpush1.msra.mxu0 0.0
      %334 = vmatprep.mubr.f32.mxu0 0.0
      %335 = vmatmul.mubr.f32.gmra.mrb[0].mxu0 %v265
      %v336 = vpop.f32.mrb[0].mxu0
      %v337 = vadd.f32 %v262, %v336
      %v338 = vpop.f32.mrb[0].mxu0
      %339 = vmatprep.mubr.f32.mxu0 0.0
      %340 = vmatmul.mubr.f32.gmra.mrb[0].mxu0 %v268
      %v341 = vpop.f32.mrb[0].mxu0
      %v342 = vadd.f32 %v262, %v341
      %v343 = vpop.f32.mrb[0].mxu0
      %344 = vdwg.mxu0
      %345 = vmax.xlane.f32.xlu0 %v337
      %v346 = vpop.xlane.xlu0 %345
      %347 = vmax.xlane.f32.xlu0 %v342
      %v348 = vpop.xlane.xlu0 %347
      %v349 = vsub.f32 %v337, %v346
      %v350 = vsub.f32 %v342, %v348
      %v351 = vmul.f32 %v349, 1.442695
      %v352 = vpow.pop %v351
      %v353 = vmul.f32 %v350, 1.442695
      %v354 = vpow.pop %v353
      %355 = vadd.xlane.f32.xlu0 %v352
      %v356 = vpop.xlane.xlu0 %355
      %357 = vadd.xlane.f32.xlu0 %v354
      %v358 = vpop.xlane.xlu0 %357
      %v359 = vrcp.pop %v356
      %v360 = vmul.f32 %v352, %v359
      %v361 = vrcp.pop %v358
      %v362 = vmul.f32 %v354, %v361
      %363 = vst [vmem:[%s6] sm:$0xff] %v360
      %364 = vst [vmem:[%s6 + $0x8] sm:$0xff] %v362
      %v365 = vld [vmem:[%s4] sm:$0x1]
      %367 = vset.pattern.permute.xlu0 0
      %368 = vperm.xlu0 %367, %v360
      %v369 = vpop.permute.xlu0 %368
      %372 = vset.pattern.permute.xlu0 0
      %373 = vperm.xlu0 %372, %v362
      %v374 = vpop.permute.xlu0 %373
      %v376 = vlaneseq
      %v377 = vshrl.u32 %v376, 7
      %v378 = vsub.s32 0, %v377
      %v379 = vrot.slane %v365, %v378
      %v380 = vmul.f32 %v369, %v379
      %v381 = vmul.f32 %v374, %v379
      %v382 = vld [vmem:[%s4 + $0x1] sm:$0x1]
      %383 = vset.pattern.permute.xlu0 1
      %384 = vperm.xlu0 %383, %v360
      %v385 = vpop.permute.xlu0 %384
      %387 = vset.pattern.permute.xlu0 1
      %388 = vperm.xlu0 %387, %v362
      %v389 = vpop.permute.xlu0 %388
      %v391 = vlaneseq
      %v392 = vshrl.u32 %v391, 7
      %v393 = vsub.s32 0, %v392
      %v394 = vrot.slane %v382, %v393
      %v395 = vmul.f32 %v385, %v394
      %v396 = vmul.f32 %v389, %v394
      %v397 = vadd.f32 %v380, %v395
      %v398 = vadd.f32 %v381, %v396
      %399 = vst [vmem:[#allocation3] sm:$0xff] %v397
      %400 = vst [vmem:[#allocation3 + $0x8] sm:$0xff] %v398
    $region29: #{sentiment_autoencoder_forward.1} parent=1 // pred_fallthru
      _
    // Predicated region
    $region30: #{sentiment_autoencoder_forward.1} parent=1 // pred_check
      _
    $region31: #{sentiment_autoencoder_forward.1} parent=1 // pred_check_branch
      %402 = sbr.rel (0) target = $region33
    $region32: #{sentiment_autoencoder_forward.1} parent=1 // pred_region
      %s404 = ssub.s32 256, 256
      %405 = vsyncadd [#allocation4], %s404
      %s406 = sshll.u32 [#allocation3], 4
      %s407 = int_to_ptr.vmem [resolvable:$true] %s406
      %412 = dma.vmem_to_hbm [thread:$0]  %s407, 256, %s5, [#allocation4], 128, 128, 8
    $region33: #{sentiment_autoencoder_forward.1} parent=1 // pred_fallthru
      _
    // Predicated region
    $region34: #{sentiment_autoencoder_forward.1} parent=1 // pred_check
      _
    $region35: #{sentiment_autoencoder_forward.1} parent=1 // pred_check_branch
      %414 = sbr.rel (0) target = $region37
    $region36: #{sentiment_autoencoder_forward.1} parent=1 // pred_region
      _
    $region37: #{sentiment_autoencoder_forward.1} parent=1 // pred_fallthru
      _
    // Predicated region
    $region38: #{sentiment_autoencoder_forward.1} parent=1 // pred_check
      _
    $region39: #{sentiment_autoencoder_forward.1} parent=1 // pred_check_branch
      %416 = sbr.rel (0) target = $region41
    $region40: #{sentiment_autoencoder_forward.1} parent=1 // pred_region
      %417 = dma.done [#allocation4], 256
    $region41: #{sentiment_autoencoder_forward.1} parent=1 // pred_fallthru
      _
    // Predicated region
    $region42: #{sentiment_autoencoder_forward.1} parent=1 // pred_check
      _
    $region43: #{sentiment_autoencoder_forward.1} parent=1 // pred_check_branch
      %419 = sbr.rel (0) target = $region45
    $region44: #{sentiment_autoencoder_forward.1} parent=1 // pred_region
      _
    $region45: #{sentiment_autoencoder_forward.1} parent=1 // pred_fallthru
      _
    %420 = vsyncpa [#allocation4], 1

</llo_original>
